<compile_context>
chip_gen: v6e
topology: v6e:2x2x1
jax: 0.10.0
libtpu: 0.0.40
codegen_flags: <defaults>
</compile_context>

<pallas_src>
import jax
import jax.numpy as jnp
from jax.experimental import pallas as pl
from jax.experimental.pallas import tpu as pltpu

HP = 16    # padded hidden width (real hidden = 10); narrow lane dim in HBM
NP = 128   # lane-dense padded output width (real output = 1 column)


def mlp_kernel(x_ref, w1_ref, b1_ref, w2_ref, b2_ref, o_ref, acc_ref):
    k = pl.program_id(1)

    @pl.when(k == 0)
    def _():
        acc_ref[...] = jnp.zeros_like(acc_ref)

    # fc1 partial product: [tm, tk] @ [tk, 16] -> f32 accumulator (MXU, bf16 in)
    xb = x_ref[...].astype(jnp.bfloat16)
    acc_ref[...] += jnp.dot(xb, w1_ref[...], preferred_element_type=jnp.float32)

    @pl.when(k == pl.num_programs(1) - 1)
    def _():
        # bias + ReLU on the narrow (tm, 16) hidden tile
        h = jnp.maximum(acc_ref[...] + b1_ref[...], 0.0)
        # fc2 epilogue: bf16 x bf16, f32 accumulate; w2 zero-padded to 128 cols
        out = jnp.dot(h.astype(jnp.bfloat16), w2_ref[...],
                      preferred_element_type=jnp.float32)
        # scalar bias from SMEM; lane-dense (tm, 128) store
        o_ref[...] = (out + b2_ref[0, 0]).astype(o_ref.dtype)


def _round_up(n, m):
    return ((n + m - 1) // m) * m


def prepare_params(w1, b1, w2, b2, *, tk_max=4096):
    """One-time (per model) pad + cast of the weights for the kernel.

    w1:[V,H], b1:[1,H], w2:[H,1], b2:[1,1]  (H <= 16).
    """
    V, H = w1.shape
    assert H <= HP, f"hidden {H} > {HP}"

    tk = min(tk_max, _round_up(V, 128))
    Vp = _round_up(V, tk)

    w1p = jnp.zeros((Vp, HP), jnp.bfloat16).at[:V, :H].set(w1.astype(jnp.bfloat16))
    b1p = jnp.zeros((1, HP), jnp.float32).at[0, :H].set(
        jnp.asarray(b1, jnp.float32).reshape(-1))
    w2p = jnp.zeros((HP, NP), jnp.bfloat16).at[:H, :1].set(w2.astype(jnp.bfloat16))
    b2p = jnp.asarray(b2, jnp.float32).reshape(1, 1)

    return {"w1": w1p, "b1": b1p, "w2": w2p, "b2": b2p,
            "tk": tk, "vocab": V, "hidden": H}


def text_classifier(x, params, *, tm_max=512):
    """fc2(relu(fc1(x))) for x:[B,V]; returns [B,1] float32."""
    B, V = x.shape
    assert V == params["vocab"]
    tk = params["tk"]
    Vp = params["w1"].shape[0]

    # ---- M tiling: big tiles, but keep >= 2 M blocks when batch allows so
    # v7x's second TensorCore gets work on the "parallel" axis. ---------------
    tm = min(tm_max, _round_up(B, 16))
    if B > 16 and _round_up(B, tm) // tm < 2:
        tm = _round_up(-(-B // 2), 16)
    Bp = _round_up(B, tm)

    # ---- x: pad only if required; pad+cast to bf16 in one pass. Otherwise
    # pass through unchanged (cast to bf16 per tile inside the kernel). -------
    if (Bp, Vp) != (B, V):
        xk = jnp.zeros((Bp, Vp), jnp.bfloat16).at[:B, :V].set(x.astype(jnp.bfloat16))
    else:
        xk = x
    x_bytes = xk.dtype.itemsize

    grid = (Bp // tm, Vp // tk)
    m_blocks = grid[0]

    # ---- explicit VMEM budget (double-buffered tiles; lane-padded in VMEM) --
    vmem_needed = (2 * tm * tk * x_bytes        # x
                   + 2 * tk * 128 * 2           # w1 (16 lanes padded to 128 in VMEM)
                   + 2 * tm * NP * 4            # output tile
                   + tm * 128 * 4               # accumulator scratch
                   + 4 * 128 * 128)             # b1 / w2 / slack
    vmem_limit = int(min(max(vmem_needed * 3 // 2, 16 * 1024 * 1024),
                         40 * 1024 * 1024))

    flops = 2 * Bp * Vp * HP + 2 * Bp * HP * NP
    bytes_accessed = (Bp * Vp * x_bytes              # x streamed once
                      + m_blocks * Vp * HP * 2       # w1 re-fetched per M block
                      + Bp * NP * 4                  # output store
                      + HP * NP * 2 + HP * 4 + 4)    # w2, b1, b2

    out = pl.pallas_call(
        mlp_kernel,
        out_shape=jax.ShapeDtypeStruct((Bp, NP), jnp.float32),
        grid_spec=pltpu.PrefetchScalarGridSpec(
            num_scalar_prefetch=0,
            grid=grid,
            in_specs=[
                pl.BlockSpec((tm, tk), lambda i, k: (i, k)),   # x (f32 or bf16)
                pl.BlockSpec((tk, HP), lambda i, k: (k, 0)),   # w1 (bf16, narrow)
                pl.BlockSpec((1, HP), lambda i, k: (0, 0)),    # b1 (f32)
                pl.BlockSpec((HP, NP), lambda i, k: (0, 0)),   # w2 (bf16, padded)
                pl.BlockSpec(memory_space=pltpu.SMEM),         # b2 scalar
            ],
            out_specs=pl.BlockSpec((tm, NP), lambda i, k: (i, 0)),
            scratch_shapes=[pltpu.VMEM((tm, HP), jnp.float32)],
        ),
        compiler_params=pltpu.CompilerParams(
            dimension_semantics=("parallel", "arbitrary"),
            vmem_limit_bytes=vmem_limit),
        cost_estimate=pl.CostEstimate(
            flops=flops, transcendentals=0, bytes_accessed=bytes_accessed),
    )(xk, params["w1"], params["b1"], params["w2"], params["b2"])

    return out[:B, :1]


def init_params(key, vocab, hidden=10, out=1):
    # Deterministic init mimicking PyTorch nn.Linear default:
    # U(-1/sqrt(fan_in), 1/sqrt(fan_in)) for both weight and bias.
    k1, k2, k3, k4 = jax.random.split(key, 4)
    lim1 = 1.0 / jnp.sqrt(vocab)
    lim2 = 1.0 / jnp.sqrt(hidden)
    w1 = jax.random.uniform(k1, (vocab, hidden), jnp.float32, -lim1, lim1)
    b1 = jax.random.uniform(k2, (1, hidden), jnp.float32, -lim1, lim1)
    w2 = jax.random.uniform(k3, (hidden, out), jnp.float32, -lim2, lim2)
    b2 = jax.random.uniform(k4, (1, out), jnp.float32, -lim2, lim2)
    return w1, b1, w2, b2


if __name__ == "__main__":
    key = jax.random.PRNGKey(0)
    kx, kp = jax.random.split(key)

    batch, vocab, hidden = 8, 128, 10
    # Synthetic bag-of-words style counts (non-negative floats).
    x = jax.random.randint(kx, (batch, vocab), 0, 3).astype(jnp.float32)

    w1, b1, w2, b2 = init_params(kp, vocab, hidden)

    # One-time weight preparation (hoisted out of the per-call path).
    params = prepare_params(w1, b1, w2, b2)

    out = text_classifier(x, params)
    out = jax.block_until_ready(out)

    # Pure-JAX reference using the same bf16 quantization the kernel applies
    # (x, w1 on the fc1 MXU; h, w2 on the fc2 epilogue).
    xb = x.astype(jnp.bfloat16).astype(jnp.float32)
    w1b = w1.astype(jnp.bfloat16).astype(jnp.float32)
    h_ref = jnp.maximum(jnp.dot(xb, w1b, precision="highest") + b1, 0.0)
    hb = h_ref.astype(jnp.bfloat16).astype(jnp.float32)
    w2b = w2.astype(jnp.bfloat16).astype(jnp.float32)
    ref = jnp.dot(hb, w2b, precision="highest") + b2

    assert out.shape == (batch, 1)
    err = jnp.max(jnp.abs(out - ref))
    assert jnp.allclose(out, ref, atol=5e-3, rtol=5e-3), f"max abs err {err}"

    print("KERNEL_OK")
</pallas_src>

<mosaic_0001>
module attributes {stable_mosaic.version = 11 : i64} {
  func.func @mlp_kernel(%arg0: i32, %arg1: i32, %arg2: memref<16x128xbf16, #tpu.memory_space<vmem>>, %arg3: memref<128x16xbf16, #tpu.memory_space<vmem>>, %arg4: memref<1x16xf32, #tpu.memory_space<vmem>>, %arg5: memref<16x128xbf16, #tpu.memory_space<vmem>>, %arg6: memref<1x1xf32, #tpu.memory_space<smem>>, %arg7: memref<16x128xf32, #tpu.memory_space<vmem>>, %arg8: memref<16x16xf32, #tpu.memory_space<vmem>>) attributes {dimension_semantics = [#tpu.dimension_semantics<parallel>, #tpu.dimension_semantics<arbitrary>], iteration_bounds = array<i64: 1, 1>, scalar_prefetch = 0 : i64, scratch_operands = 1 : i64, tpu.core_type = #tpu.core_type<tc>, window_params = [{transform_indices = @transform_0, window_bounds = array<i64: 16, 128>}, {transform_indices = @transform_1, window_bounds = array<i64: 128, 16>}, {pipeline_mode = #tpu.pipeline_mode<synchronous>, transform_indices = @transform_2, window_bounds = array<i64: 1, 16>}, {pipeline_mode = #tpu.pipeline_mode<synchronous>, transform_indices = @transform_3, window_bounds = array<i64: 16, 128>}, {transform_indices = @transform_4, window_bounds = array<i64: 1, 1>}, {transform_indices = @transform_5, window_bounds = array<i64: 16, 128>}]} {
    %c0_i32 = arith.constant 0 : i32
    %0 = arith.cmpi eq, %arg1, %c0_i32 : i32
    %1 = arith.extui %0 : i1 to i32
    %c0_i32_0 = arith.constant 0 : i32
    %2 = arith.cmpi ne, %1, %c0_i32_0 : i32
    scf.if %2 {
      %cst_10 = arith.constant 0.000000e+00 : f32
      %12 = vector.broadcast %cst_10 : f32 to vector<16x16xf32>
      %c0_11 = arith.constant 0 : index
      %c0_12 = arith.constant 0 : index
      %13 = vector.load %arg8[%c0_11, %c0_12] : memref<16x16xf32, #tpu.memory_space<vmem>>, vector<16x16xf32>
      tpu.vector_store %arg8[%c0_11, %c0_12], %12 {strides = array<i32>} : memref<16x16xf32, #tpu.memory_space<vmem>>, vector<16x16xf32>,
    } else {
    }
    %c0 = arith.constant 0 : index
    %c0_1 = arith.constant 0 : index
    %3 = vector.load %arg2[%c0, %c0_1] : memref<16x128xbf16, #tpu.memory_space<vmem>>, vector<16x128xbf16>
    %c0_2 = arith.constant 0 : index
    %c0_3 = arith.constant 0 : index
    %4 = vector.load %arg8[%c0_2, %c0_3] : memref<16x16xf32, #tpu.memory_space<vmem>>, vector<16x16xf32>
    %c0_4 = arith.constant 0 : index
    %c0_5 = arith.constant 0 : index
    %5 = vector.load %arg3[%c0_4, %c0_5] : memref<128x16xbf16, #tpu.memory_space<vmem>>, vector<128x16xbf16>
    %cst = arith.constant dense<0.000000e+00> : vector<16x16xf32>
    %6 = tpu.matmul %3, %5, %cst {dimension_numbers = #tpu.dot_dimension_numbers<[1], [0], [0], [1], [0, 0, 1, 1], [], []>} : vector<16x128xbf16>, vector<128x16xbf16>, vector<16x16xf32> -> vector<16x16xf32>
    %7 = arith.addf %4, %6 : vector<16x16xf32>
    %c0_6 = arith.constant 0 : index
    %c0_7 = arith.constant 0 : index
    %8 = vector.load %arg8[%c0_6, %c0_7] : memref<16x16xf32, #tpu.memory_space<vmem>>, vector<16x16xf32>
    tpu.vector_store %arg8[%c0_6, %c0_7], %7 {strides = array<i32>} : memref<16x16xf32, #tpu.memory_space<vmem>>, vector<16x16xf32>,
    %c0_i32_8 = arith.constant 0 : i32
    %9 = arith.cmpi eq, %arg1, %c0_i32_8 : i32
    %10 = arith.extui %9 : i1 to i32
    %c0_i32_9 = arith.constant 0 : i32
    %11 = arith.cmpi ne, %10, %c0_i32_9 : i32
    scf.if %11 {
      %c0_10 = arith.constant 0 : index
      %c0_11 = arith.constant 0 : index
      %12 = vector.load %arg8[%c0_10, %c0_11] : memref<16x16xf32, #tpu.memory_space<vmem>>, vector<16x16xf32>
      %c0_12 = arith.constant 0 : index
      %c0_13 = arith.constant 0 : index
      %13 = vector.load %arg4[%c0_12, %c0_13] : memref<1x16xf32, #tpu.memory_space<vmem>>, vector<1x16xf32>
      %14 = vector.broadcast %13 : vector<1x16xf32> to vector<16x16xf32>
      %15 = arith.addf %12, %14 : vector<16x16xf32>
      %cst_14 = arith.constant 0.000000e+00 : f32
      %16 = vector.broadcast %cst_14 : f32 to vector<16x16xf32>
      %17 = arith.maximumf %15, %16 : vector<16x16xf32>
      %18 = arith.truncf %17 : vector<16x16xf32> to vector<16x16xbf16>
      %c0_15 = arith.constant 0 : index
      %c0_16 = arith.constant 0 : index
      %19 = vector.load %arg5[%c0_15, %c0_16] : memref<16x128xbf16, #tpu.memory_space<vmem>>, vector<16x128xbf16>
      %cst_17 = arith.constant dense<0.000000e+00> : vector<16x128xf32>
      %20 = tpu.matmul %18, %19, %cst_17 {dimension_numbers = #tpu.dot_dimension_numbers<[1], [0], [0], [1], [0, 0, 1, 1], [], []>} : vector<16x16xbf16>, vector<16x128xbf16>, vector<16x128xf32> -> vector<16x128xf32>
      %c0_18 = arith.constant 0 : index
      %c0_19 = arith.constant 0 : index
      %21 = memref.load %arg6[%c0_18, %c0_19] : memref<1x1xf32, #tpu.memory_space<smem>>
      %22 = vector.broadcast %21 : f32 to vector<16x128xf32>
      %23 = arith.addf %20, %22 : vector<16x128xf32>
      %c0_20 = arith.constant 0 : index
      %c0_21 = arith.constant 0 : index
      %24 = vector.load %arg7[%c0_20, %c0_21] : memref<16x128xf32, #tpu.memory_space<vmem>>, vector<16x128xf32>
      tpu.vector_store %arg7[%c0_20, %c0_21], %23 {strides = array<i32>} : memref<16x128xf32, #tpu.memory_space<vmem>>, vector<16x128xf32>,
    } else {
    }
    return
  }
  func.func @transform_0(%arg0: i32, %arg1: i32) -> (i32, i32) {
    %c0_i32 = arith.constant 0 : i32
    return %arg0, %arg1 : i32, i32
  }
  func.func @transform_1(%arg0: i32, %arg1: i32) -> (i32, i32) {
    %c0_i32 = arith.constant 0 : i32
    %c0_i32_0 = arith.constant 0 : i32
    return %arg1, %c0_i32 : i32, i32
  }
  func.func @transform_2(%arg0: i32, %arg1: i32) -> (i32, i32) {
    %c0_i32 = arith.constant 0 : i32
    %c0_i32_0 = arith.constant 0 : i32
    %c0_i32_1 = arith.constant 0 : i32
    return %c0_i32, %c0_i32_0 : i32, i32
  }
  func.func @transform_3(%arg0: i32, %arg1: i32) -> (i32, i32) {
    %c0_i32 = arith.constant 0 : i32
    %c0_i32_0 = arith.constant 0 : i32
    %c0_i32_1 = arith.constant 0 : i32
    return %c0_i32, %c0_i32_0 : i32, i32
  }
  func.func @transform_4(%arg0: i32, %arg1: i32) -> (i32, i32) {
    %c0_i32 = arith.constant 0 : i32
    %c0_i32_0 = arith.constant 0 : i32
    %c0_i32_1 = arith.constant 0 : i32
    return %c0_i32, %c0_i32_0 : i32, i32
  }
  func.func @transform_5(%arg0: i32, %arg1: i32) -> (i32, i32) {
    %c0_i32 = arith.constant 0 : i32
    %c0_i32_0 = arith.constant 0 : i32
    return %arg0, %c0_i32 : i32, i32
  }
}

</mosaic_0001>

<llo_original>
// kernel: tpu_custom_call.1
$region0: #{tpu_custom_call.1}
  #allocation0 [shape = 'u32[]', space=smem, size = 0x4, offset = 0x4, fixed_abs, tag = 'smem constant byte address 0x4 - core index']
  #allocation1 [shape = 'u32[144,128]{1,0:T(1,128)}', space=vmem, size = 0x12000, scoped, tag = 'internal scratch']
  #allocation2 [shape = 'f32[16,16]{1,0:T(8,128)}', space=vmem, size = 0x2000, scoped, tag = 'scratch operand']
  #allocation3 [shape = 'f32[1,1]{1,0:T(1,128)S(6)}', space=smem, size = 0x200, scoped, tag = 'scoped memory for tpu_custom_call.1']
  %s0 = inlined_call_operand.vmem [shape: bf16[16,128], index: 0, kind: input, shape index: {}]
  %s1 = inlined_call_operand.vmem [shape: bf16[128,16], index: 1, kind: input, shape index: {}]
  %s2 = inlined_call_operand.vmem [shape: f32[1,16], index: 2, kind: input, shape index: {}]
  %s3 = inlined_call_operand.vmem [shape: bf16[16,128], index: 3, kind: input, shape index: {}]
  %s4 = inlined_call_operand.<no memory space> [shape: f32[1,1], index: 4, kind: input, shape index: {}]
  %s5 = inlined_call_operand.hbm [shape: f32[16,128], index: 5, kind: output, shape index: {}]
  %s6 = sld [smem:[#allocation0]]
  $region38: #{tpu_custom_call.1} parent=0
    _
  %s8 = ssub.s32 1, %s6
  %s9 = scalar_select 0, %s8, %s6
  %10 = sst [smem:[#allocation3]] %s4
  $region1: #{tpu_custom_call.1} parent=0
    #allocation4 [shape = 'u8[8192]{0}', space=vmem, size = 0x2000, scoped, tag = 'output window, operand 0, single buffered']
    #allocation5 [shape = 's32[1]{0}', space=sflag, size = 0x4, scoped, tag = 'scoped memory for tpu_custom_call.1']
    %11 = vsyncpa [#allocation5], 0
    // Predicated region
    $region2: #{tpu_custom_call.1} parent=1 // pred_check
      _
    $region3: #{tpu_custom_call.1} parent=1 // pred_check_branch
      %13 = sbr.rel (0) target = $region5
    $region4: #{tpu_custom_call.1} parent=1 // pred_region
      _
    $region5: #{tpu_custom_call.1} parent=1 // pred_fallthru
      _
    // Predicated region
    $region6: #{tpu_custom_call.1} parent=1 // pred_check
      _
    $region7: #{tpu_custom_call.1} parent=1 // pred_check_branch
      %15 = sbr.rel (0) target = $region9
    $region8: #{tpu_custom_call.1} parent=1 // pred_region
      _
    $region9: #{tpu_custom_call.1} parent=1 // pred_fallthru
      _
    // Predicated region
    $region10: #{tpu_custom_call.1} parent=1 // pred_check
      _
    $region11: #{tpu_custom_call.1} parent=1 // pred_check_branch
      %17 = sbr.rel (0) target = $region13
    $region12: #{tpu_custom_call.1} parent=1 // pred_region
      _
    $region13: #{tpu_custom_call.1} parent=1 // pred_fallthru
      _
    // Predicated region
    $region14: #{tpu_custom_call.1} parent=1 // pred_check
      _
    $region15: #{tpu_custom_call.1} parent=1 // pred_check_branch
      %19 = sbr.rel (0) target = $region17
    $region16: #{tpu_custom_call.1} parent=1 // pred_region
      _
    $region17: #{tpu_custom_call.1} parent=1 // pred_fallthru
      _
    // Predicated region
    $region18: #{tpu_custom_call.1} parent=1 // pred_check
      _
    $region19: #{tpu_custom_call.1} parent=1 // pred_check_branch
      %21 = sbr.rel (0) target = $region21
    $region20: #{tpu_custom_call.1} parent=1 // pred_region
      _
    $region21: #{tpu_custom_call.1} parent=1 // pred_fallthru
      _
    %p23 = scmp.eq.s32.totalorder 0, 0
    // Predicated region
    $region22: #{tpu_custom_call.1} parent=1 // pred_check
      %p24 = pneg %p23
    $region23: #{tpu_custom_call.1} parent=1 // pred_check_branch
      %26 = sbr.rel (%p24) target = $region25
    $region24: #{tpu_custom_call.1} parent=1 // pred_region
      %vm27 = vcmask 130048
      %28 = vst.msk [vmem:[#allocation2] sm:$0xff] %vm27, 0.0
      %29 = vst.msk [vmem:[#allocation2 + $0x8] sm:$0xff] %vm27, 0.0
    $region25: #{tpu_custom_call.1} parent=1 // pred_fallthru
      _
    %v30 = vld [vmem:[%s0] sm:$0xf]
    %v31 = vld [vmem:[%s0 + $0x4] sm:$0xf]
    %v32 = vld [vmem:[#allocation2] sm:$0xff]
    %v33 = vld [vmem:[#allocation2 + $0x8] sm:$0xff]
    %v34 = vld [vmem:[%s1] sm:$0xf]
    %v35 = vld [vmem:[%s1 + $0x4] sm:$0xf]
    %v36 = vld [vmem:[%s1 + $0x8] sm:$0xf]
    %v37 = vld [vmem:[%s1 + $0xc] sm:$0xf]
    %v38 = vld [vmem:[%s1 + $0x10] sm:$0xf]
    %v39 = vld [vmem:[%s1 + $0x14] sm:$0xf]
    %v40 = vld [vmem:[%s1 + $0x18] sm:$0xf]
    %v41 = vld [vmem:[%s1 + $0x1c] sm:$0xf]
    %v42 = vld [vmem:[%s1 + $0x20] sm:$0xf]
    %v43 = vld [vmem:[%s1 + $0x24] sm:$0xf]
    %v44 = vld [vmem:[%s1 + $0x28] sm:$0xf]
    %v45 = vld [vmem:[%s1 + $0x2c] sm:$0xf]
    %v46 = vld [vmem:[%s1 + $0x30] sm:$0xf]
    %v47 = vld [vmem:[%s1 + $0x34] sm:$0xf]
    %v48 = vld [vmem:[%s1 + $0x38] sm:$0xf]
    %v49 = vld [vmem:[%s1 + $0x3c] sm:$0xf]
    %v52 = vunpack.c.l.b16 %v30
    %v53 = vunpack.c.l.b16 %v31
    %v54 = vpack.c.b16 %v53, %v52
    %v72 = vunpack.c.l.b16 %v34
    %v73 = vunpack.c.l.b16 %v35
    %v74 = vunpack.c.l.b16 %v36
    %v75 = vunpack.c.l.b16 %v37
    %v76 = vunpack.c.l.b16 %v38
    %v77 = vunpack.c.l.b16 %v39
    %v78 = vunpack.c.l.b16 %v40
    %v79 = vunpack.c.l.b16 %v41
    %v80 = vunpack.c.l.b16 %v42
    %v81 = vunpack.c.l.b16 %v43
    %v82 = vunpack.c.l.b16 %v44
    %v83 = vunpack.c.l.b16 %v45
    %v84 = vunpack.c.l.b16 %v46
    %v85 = vunpack.c.l.b16 %v47
    %v86 = vunpack.c.l.b16 %v48
    %v87 = vunpack.c.l.b16 %v49
    %v88 = vpack.c.b16 %v73, %v72
    %v89 = vpack.c.b16 %v75, %v74
    %v90 = vpack.c.b16 %v77, %v76
    %v91 = vpack.c.b16 %v79, %v78
    %v92 = vpack.c.b16 %v81, %v80
    %v93 = vpack.c.b16 %v83, %v82
    %v94 = vpack.c.b16 %v85, %v84
    %v95 = vpack.c.b16 %v87, %v86
    %104 = vmatprep.subr.bf16.mxu0 0
    %105 = vmatpush1.bf16.msra.mxu0 %v95
    %106 = vmatprep.subr.bf16.mxu0 0
    %107 = vmatpush1.bf16.msra.mxu0 %v94
    %108 = vmatprep.subr.bf16.mxu0 0
    %109 = vmatpush1.bf16.msra.mxu0 %v93
    %110 = vmatprep.subr.bf16.mxu0 0
    %111 = vmatpush1.bf16.msra.mxu0 %v92
    %112 = vmatprep.subr.bf16.mxu0 0
    %113 = vmatpush1.bf16.msra.mxu0 %v91
    %114 = vmatprep.subr.bf16.mxu0 0
    %115 = vmatpush1.bf16.msra.mxu0 %v90
    %116 = vmatprep.subr.bf16.mxu0 0
    %117 = vmatpush1.bf16.msra.mxu0 %v89
    %118 = vmatprep.subr.bf16.mxu0 0
    %119 = vmatpush1.bf16.msra.mxu0 %v88
    %120 = vmatprep.subr.bf16.mxu0 0
    %121 = vmatpush2.bf16.msra.mxu0 0
    %122 = vmatprep.subr.bf16.mxu0 0
    %123 = vmatpush2.bf16.msra.mxu0 0
    %124 = vmatprep.subr.bf16.mxu0 0
    %125 = vmatpush2.bf16.msra.mxu0 0
    %126 = vmatprep.subr.bf16.mxu0 0
    %127 = vmatpush2.bf16.msra.mxu0 0
    %128 = vmatprep.subr.bf16.mxu0 0
    %129 = vmatpush2.bf16.msra.mxu0 0
    %130 = vmatprep.subr.bf16.mxu0 0
    %131 = vmatpush2.bf16.msra.mxu0 0
    %132 = vmatprep.subr.bf16.mxu0 0
    %133 = vmatpush2.bf16.msra.mxu0 0
    %134 = vmatprep.subr.bf16.mxu0 0
    %135 = vmatpush2.bf16.msra.mxu0 0
    %136 = vmatprep.mubr.bf16.mxu0 0
    %137 = vmatmul.mubr.bf16.gmra.mxu0 %v54
    %v138 = vpop.f32.mrf.mxu0
    %v139 = vadd.f32 0.0, %v138
    %v140 = vpop.f32.mrf.mxu0
    %v141 = vpop.f32.mrf.mxu0
    %v142 = vadd.f32 0.0, %v141
    %v143 = vpop.f32.mrf.mxu0
    %144 = vdwg.mxu0
    %v145 = vadd.f32 %v32, %v139
    %v146 = vadd.f32 %v33, %v142
    %vm147 = vcmask 130048
    %148 = vst.msk [vmem:[#allocation2] sm:$0xff] %vm147, %v145
    %149 = vst.msk [vmem:[#allocation2 + $0x8] sm:$0xff] %vm147, %v146
    // Predicated region
    $region26: #{tpu_custom_call.1} parent=1 // pred_check
      %p150 = pneg %p23
    $region27: #{tpu_custom_call.1} parent=1 // pred_check_branch
      %152 = sbr.rel (%p150) target = $region29
    $region28: #{tpu_custom_call.1} parent=1 // pred_region
      %v153 = vld [vmem:[#allocation2] sm:$0xff]
      %v154 = vld [vmem:[#allocation2 + $0x8] sm:$0xff]
      %v155 = vld [vmem:[%s2] sm:$0x1]
      %v157 = vlaneseq
      %v158 = vshrl.u32 %v157, 7
      %v159 = vsub.s32 0, %v158
      %v160 = vrot.slane %v155, %v159
      %v162 = vadd.f32 %v153, %v160
      %v163 = vadd.f32 %v154, %v160
      %v164 = vmax.f32 %v162, 0.0
      %v165 = vmax.f32 %v163, 0.0
      %v166 = vpack.c.bf16 %v165, %v164
      %v167 = vld [vmem:[%s3] sm:$0xf]
      %v168 = vld [vmem:[%s3 + $0x4] sm:$0xf]
      %s169 = sld [smem:[#allocation3]]
      %v170 = vstv %s169
      %v173 = vunpack.c.l.b16 %v167
      %v174 = vunpack.c.l.b16 %v168
      %v175 = vpack.c.b16 %v174, %v173
      %v178 = vsel %vm147, %v166, 0
      %180 = vmatprep.subr.bf16.mxu0 0
      %181 = vmatpush1.bf16.msra.mxu0 0
      %182 = vmatprep.subr.bf16.mxu0 0
      %183 = vmatpush1.bf16.msra.mxu0 0
      %184 = vmatprep.subr.bf16.mxu0 0
      %185 = vmatpush1.bf16.msra.mxu0 0
      %186 = vmatprep.subr.bf16.mxu0 0
      %187 = vmatpush1.bf16.msra.mxu0 0
      %188 = vmatprep.subr.bf16.mxu0 0
      %189 = vmatpush1.bf16.msra.mxu0 0
      %190 = vmatprep.subr.bf16.mxu0 0
      %191 = vmatpush1.bf16.msra.mxu0 0
      %192 = vmatprep.subr.bf16.mxu0 0
      %193 = vmatpush1.bf16.msra.mxu0 0
      %194 = vmatprep.subr.bf16.mxu0 0
      %195 = vmatpush1.bf16.msra.mxu0 %v175
      %196 = vmatprep.subr.bf16.mxu0 0
      %197 = vmatpush2.bf16.msra.mxu0 0
      %198 = vmatprep.subr.bf16.mxu0 0
      %199 = vmatpush2.bf16.msra.mxu0 0
      %200 = vmatprep.subr.bf16.mxu0 0
      %201 = vmatpush2.bf16.msra.mxu0 0
      %202 = vmatprep.subr.bf16.mxu0 0
      %203 = vmatpush2.bf16.msra.mxu0 0
      %204 = vmatprep.subr.bf16.mxu0 0
      %205 = vmatpush2.bf16.msra.mxu0 0
      %206 = vmatprep.subr.bf16.mxu0 0
      %207 = vmatpush2.bf16.msra.mxu0 0
      %208 = vmatprep.subr.bf16.mxu0 0
      %209 = vmatpush2.bf16.msra.mxu0 0
      %210 = vmatprep.subr.bf16.mxu0 0
      %211 = vmatpush2.bf16.msra.mxu0 0
      %212 = vmatprep.mubr.bf16.mxu0 0
      %213 = vmatmul.mubr.bf16.gmra.mxu0 %v178
      %v214 = vpop.f32.mrf.mxu0
      %v215 = vadd.f32 %v170, %v214
      %v216 = vpop.f32.mrf.mxu0
      %v217 = vpop.f32.mrf.mxu0
      %v218 = vadd.f32 %v170, %v217
      %v219 = vpop.f32.mrf.mxu0
      %220 = vdwg.mxu0
      %221 = vst [vmem:[#allocation4] sm:$0xff] %v215
      %222 = vst [vmem:[#allocation4 + $0x8] sm:$0xff] %v218
    $region29: #{tpu_custom_call.1} parent=1 // pred_fallthru
      _
    // Predicated region
    $region30: #{tpu_custom_call.1} parent=1 // pred_check
      _
    $region31: #{tpu_custom_call.1} parent=1 // pred_check_branch
      %224 = sbr.rel (0) target = $region33
    $region32: #{tpu_custom_call.1} parent=1 // pred_region
      %s226 = ssub.s32 256, 256
      %227 = vsyncadd [#allocation5], %s226
      %s228 = sshll.u32 [#allocation4], 4
      %s229 = int_to_ptr.vmem [resolvable:$true] %s228
      %234 = dma.vmem_to_hbm [thread:$0]  %s229, 256, %s5, [#allocation5], 128, 128, 8
    $region33: #{tpu_custom_call.1} parent=1 // pred_fallthru
      _
    // Predicated region
    $region34: #{tpu_custom_call.1} parent=1 // pred_check
      _
    $region35: #{tpu_custom_call.1} parent=1 // pred_check_branch
      %236 = sbr.rel (0) target = $region37
    $region36: #{tpu_custom_call.1} parent=1 // pred_region
      %237 = dma.done [#allocation5], 256
    $region37: #{tpu_custom_call.1} parent=1 // pred_fallthru
      _
    %238 = vsyncpa [#allocation5], 1

</llo_original>
